<compile_context>
chip_gen: v7x
topology: tpu7x:2x2x1
jax: 0.10.0
libtpu: 0.0.40
codegen_flags: <defaults>
</compile_context>

<pallas_src>
import functools

import jax
import jax.numpy as jnp
from jax.experimental import pallas as pl
from jax.experimental.pallas import tpu as pltpu

# ---- problem sizes (small, consistent with YOLO-v1 structure) ----
C = 8            # number of classes
B = 2            # bounding boxes per grid cell
S = 4            # grid size (S x S cells)
N = 2            # batch size
D = C + 5 * B    # per-cell feature width

EPS = 1e-9       # guards IoU union (degenerate / zero-padded cells)
MAX_LANE_TILE = 2048   # lane-tile width per grid step for large G

# row offsets inside the packed slab (ROWS, G_pad)
R_OCLS = 0                    # output classes        (C rows)
R_TCLS = C                    # target classes        (C rows)
R_OCF = 2 * C                 # output confidences    (B rows)
R_TCF = 2 * C + B             # target confidences    (B rows)
R_OBOX = 2 * C + 2 * B        # output boxes x|y|w|h  (4B rows, B per coord)
R_TBOX = 2 * C + 6 * B        # target boxes x|y|w|h  (4B rows)
ROWS = 2 * C + 10 * B         # = 36 for C=8, B=2


def yolo_loss_kernel(slab_ref, out_ref, acc_ref, *,
                     batch, w_coord, w_obj, w_noobj):
    gi = pl.program_id(0)

    @pl.when(gi == 0)
    def _():
        acc_ref[0, 0] = 0.0

    # ---- static sublane-row slices (each (k, TG) with G on lanes) ----
    o_cls = slab_ref[R_OCLS:R_OCLS + C, :]          # (C, TG)
    t_cls = slab_ref[R_TCLS:R_TCLS + C, :]          # (C, TG)
    o_cf = slab_ref[R_OCF:R_OCF + B, :]             # (B, TG)
    t_cf = slab_ref[R_TCF:R_TCF + B, :]             # (B, TG)

    ox = slab_ref[R_OBOX + 0 * B:R_OBOX + 1 * B, :]  # (B, TG)
    oy = slab_ref[R_OBOX + 1 * B:R_OBOX + 2 * B, :]
    ow = slab_ref[R_OBOX + 2 * B:R_OBOX + 3 * B, :]
    oh = slab_ref[R_OBOX + 3 * B:R_OBOX + 4 * B, :]
    tx = slab_ref[R_TBOX + 0 * B:R_TBOX + 1 * B, :]
    ty = slab_ref[R_TBOX + 1 * B:R_TBOX + 2 * B, :]
    tw = slab_ref[R_TBOX + 2 * B:R_TBOX + 3 * B, :]
    th = slab_ref[R_TBOX + 3 * B:R_TBOX + 4 * B, :]

    # ---- IoU for all B box slots at once, (B, TG) ----
    ox1, oy1 = ox - 0.5 * ow, oy - 0.5 * oh
    ox2, oy2 = ox + 0.5 * ow, oy + 0.5 * oh
    tx1, ty1 = tx - 0.5 * tw, ty - 0.5 * th
    tx2, ty2 = tx + 0.5 * tw, ty + 0.5 * th
    iw = jnp.maximum(jnp.minimum(ox2, tx2) - jnp.maximum(ox1, tx1), 0.0)
    ih = jnp.maximum(jnp.minimum(oy2, ty2) - jnp.maximum(oy1, ty1), 0.0)
    inter = iw * ih
    union = (ox2 - ox1) * (oy2 - oy1) + (tx2 - tx1) * (ty2 - ty1) - inter
    # EUP approximate reciprocal instead of a VALU divide; eps keeps
    # zero-padded / degenerate cells finite (their contribution is masked).
    iou = inter * pl.reciprocal(union + EPS, approx=True)   # (B, TG)

    # ---- responsibility mask (argmax over B, first max wins), {0,1} ----
    tg = iou.shape[1]
    resp_rows = []
    for b in range(B):
        r = jnp.ones((1, tg), jnp.float32)
        for j in range(B):
            if j == b:
                continue
            cmp = (iou[b:b + 1] > iou[j:j + 1]) if j < b \
                else (iou[b:b + 1] >= iou[j:j + 1])
            r = r * cmp.astype(jnp.float32)
        resp_rows.append(r)
    resp = jnp.concatenate(resp_rows, axis=0)                # (B, TG)

    m = jnp.where(t_cf != 0.0, resp, 0.0)                    # indicator_obj
    obj = m > 0.0
    # indicator_obj_grid: all target confidences == 1 (vectorized over B)
    grid = jnp.min((t_cf == 1.0).astype(jnp.float32), axis=0, keepdims=True)

    # ---- fused per-cell summands ----
    safe = lambda v: jnp.where(obj, v, 1.0)  # sqrt only "seen" where selected
    xy_wh = ((ox - tx) ** 2 + (oy - ty) ** 2
             + (jnp.sqrt(safe(ow)) - jnp.sqrt(safe(tw))) ** 2
             + (jnp.sqrt(safe(oh)) - jnp.sqrt(safe(th))) ** 2)        # (B, TG)
    conf_obj = (o_cf - iou) ** 2                                      # (B, TG)
    summand_bg = (w_coord * m * xy_wh
                  + w_obj * m * conf_obj
                  + w_noobj * (1.0 - m) * o_cf * o_cf)                # (B, TG)
    summand_cg = (w_obj * grid) * (o_cls - t_cls) ** 2                # (C, TG)

    # ---- per-block fused reduction, accumulate across the G grid ----
    row = (jnp.sum(summand_bg, axis=0, keepdims=True)
           + jnp.sum(summand_cg, axis=0, keepdims=True))              # (1, TG)
    acc_ref[0, 0] += jnp.sum(row)

    @pl.when(gi == pl.num_programs(0) - 1)
    def _():
        out_ref[0, 0] = acc_ref[0, 0] * (1.0 / float(batch))


def _pack_slab(output, target, lane_tile):
    """(N,S,S,D) output/target -> one (ROWS, G_pad) f32 slab, G on lanes."""
    n, s, _, d = output.shape
    assert d == D
    g = n * s * s

    def feat(x):
        return x.reshape(g, d).astype(jnp.float32).T   # (D, G)

    def regroup(box):   # (4B, G) rows [x0,y0,w0,h0,x1,...] -> [x*, y*, w*, h*]
        return box.reshape(B, 4, g).transpose(1, 0, 2).reshape(4 * B, g)

    o, t = feat(output), feat(target)
    slab = jnp.concatenate(
        [o[:C], t[:C],                               # classes
         o[C:C + B], t[C:C + B],                     # confidences
         regroup(o[C + B:]), regroup(t[C + B:])],    # boxes
        axis=0)                                      # (ROWS, G)
    g_pad = ((g + lane_tile - 1) // lane_tile) * lane_tile
    slab = jnp.pad(slab, ((0, 0), (0, g_pad - g)))   # zero pad -> masked out
    return slab, n, g_pad


def yolo_loss(output, target, weights):
    """output/target: (N, S, S, C + 5B) float32 -> loss of shape (1,)."""
    n, s, _, _ = output.shape
    g = n * s * s
    # lane tile: full (padded) width for small G, fixed 2048-lane tiles for big G
    lane_tile = MAX_LANE_TILE if g >= MAX_LANE_TILE else ((g + 127) // 128) * 128
    slab, n, g_pad = _pack_slab(output, target, lane_tile)

    kernel = functools.partial(
        yolo_loss_kernel, batch=n,
        w_coord=float(weights['coord']),
        w_obj=float(weights['obj']),
        w_noobj=float(weights['noobj']))

    out = pl.pallas_call(
        kernel,
        out_shape=jax.ShapeDtypeStruct((1, 1), jnp.float32),
        grid_spec=pltpu.PrefetchScalarGridSpec(
            num_scalar_prefetch=0,
            grid=(g_pad // lane_tile,),
            in_specs=[pl.BlockSpec((ROWS, lane_tile), lambda gi: (0, gi))],
            out_specs=pl.BlockSpec(memory_space=pltpu.MemorySpace.SMEM),
            scratch_shapes=[pltpu.SMEM((1, 1), jnp.float32)]),
        compiler_params=pltpu.CompilerParams(
            dimension_semantics=("arbitrary",)),
    )(slab)
    return out.reshape(1)   # PyTorch returns a shape-(1,) tensor


def yolo_loss_ref(output, target, weights):
    """Pure-JAX reference with the same semantics (for validation)."""
    n, s, _, d = output.shape
    cls_o = output[..., :C]
    conf_o = output[..., C:C + B]
    box_o = output[..., C + B:].reshape(n, s, s, B, 4)
    cls_t = target[..., :C]
    conf_t = target[..., C:C + B]
    box_t = target[..., C + B:].reshape(n, s, s, B, 4)

    def conv(bx):
        xy, wh = bx[..., :2], bx[..., 2:]
        return jnp.concatenate([xy - wh / 2, xy + wh / 2], axis=-1)

    cb_o, cb_t = conv(box_o), conv(box_t)
    x1y1 = jnp.maximum(cb_o[..., :2], cb_t[..., :2])
    x2y2 = jnp.minimum(cb_o[..., 2:], cb_t[..., 2:])
    iwh = jnp.maximum(x2y2 - x1y1, 0.0)
    inter = iwh[..., 0] * iwh[..., 1]
    a1 = (cb_o[..., 2] - cb_o[..., 0]) * (cb_o[..., 3] - cb_o[..., 1])
    a2 = (cb_t[..., 2] - cb_t[..., 0]) * (cb_t[..., 3] - cb_t[..., 1])
    iou = inter / (a1 + a2 - inter + EPS)                  # (n, s, s, B)
    best = jnp.argmax(iou, axis=-1)
    obj = (conf_t != 0) & (best[..., None] == jnp.arange(B))
    grid = jnp.all(conf_t == 1, axis=-1)
    m = obj.astype(jnp.float32)

    xy = jnp.sum(m[..., None] * (box_o[..., :2] - box_t[..., :2]) ** 2)
    safe = lambda v: jnp.where(obj[..., None], v, 1.0)
    wh = jnp.sum(m[..., None] * (jnp.sqrt(safe(box_o[..., 2:]))
                                 - jnp.sqrt(safe(box_t[..., 2:]))) ** 2)
    cf = jnp.sum(m * (conf_o - iou) ** 2)
    ncf = jnp.sum((1.0 - m) * conf_o ** 2)
    cl = jnp.sum(grid.astype(jnp.float32)[..., None] * (cls_o - cls_t) ** 2)
    total = (weights['coord'] * (xy + wh) + weights['obj'] * cf
             + weights['noobj'] * ncf + weights['obj'] * cl)
    return total / n


if __name__ == "__main__":
    key = jax.random.PRNGKey(0)
    k1, k2, k3, k4, k5 = jax.random.split(key, 5)

    # deterministic "network output": sigmoid keeps w/h positive for the sqrt term
    output = jax.nn.sigmoid(jax.random.normal(k1, (N, S, S, D), jnp.float32))

    # deterministic YOLO-style target: some cells contain an object
    obj_cells = jax.random.bernoulli(k2, 0.4, (N, S, S)).astype(jnp.float32)
    cls_t = jax.nn.one_hot(jax.random.randint(k3, (N, S, S), 0, C), C)
    conf_t = jnp.ones((N, S, S, B), jnp.float32)
    xy_t = jax.random.uniform(k4, (N, S, S, B, 2), minval=0.2, maxval=0.8)
    wh_t = jax.random.uniform(k5, (N, S, S, B, 2), minval=0.1, maxval=0.5)
    box_t = jnp.concatenate([xy_t, wh_t], axis=-1).reshape(N, S, S, 4 * B)
    target = jnp.concatenate([cls_t, conf_t, box_t], axis=-1) * obj_cells[..., None]

    # weights as in the original YOLO-v1 paper (deterministic, in-script)
    weights = {'coord': 5.0, 'obj': 1.0, 'noobj': 0.5}

    loss = jax.block_until_ready(yolo_loss(output, target, weights))
    ref = jax.block_until_ready(yolo_loss_ref(output, target, weights))

    assert jnp.isfinite(loss).all()
    assert jnp.allclose(loss[0], ref, rtol=1e-3, atol=1e-3), (loss, ref)
    print("KERNEL_OK")
</pallas_src>

<mosaic_0001>
module attributes {stable_mosaic.version = 11 : i64} {
  func.func @yolo_loss_kernel(%arg0: i32, %arg1: memref<36x128xf32, #tpu.memory_space<vmem>>, %arg2: memref<1x1xf32, #tpu.memory_space<smem>>, %arg3: memref<1x1xf32, #tpu.memory_space<smem>>) attributes {dimension_semantics = [#tpu.dimension_semantics<arbitrary>], iteration_bounds = array<i64: 1>, scalar_prefetch = 0 : i64, scratch_operands = 1 : i64, tpu.core_type = #tpu.core_type<tc>, window_params = [{transform_indices = @transform_0, window_bounds = array<i64: 36, 128>}, {transform_indices = @transform_1, window_bounds = array<i64: 1, 1>}]} {
    %c0_i32 = arith.constant 0 : i32
    %0 = arith.cmpi eq, %arg0, %c0_i32 : i32
    %1 = arith.extui %0 : i1 to i32
    %c0_i32_0 = arith.constant 0 : i32
    %2 = arith.cmpi ne, %1, %c0_i32_0 : i32
    scf.if %2 {
      %cst_48 = arith.constant 0.000000e+00 : f32
      %c0_49 = arith.constant 0 : index
      %c0_50 = arith.constant 0 : index
      %149 = memref.load %arg3[%c0_49, %c0_50] : memref<1x1xf32, #tpu.memory_space<smem>>
      memref.store %cst_48, %arg3[%c0_49, %c0_50] : memref<1x1xf32, #tpu.memory_space<smem>>
    } else {
    }
    %c0 = arith.constant 0 : index
    %c0_1 = arith.constant 0 : index
    %3 = vector.load %arg1[%c0, %c0_1] : memref<36x128xf32, #tpu.memory_space<vmem>>, vector<8x128xf32>
    %c8 = arith.constant 8 : index
    %c0_2 = arith.constant 0 : index
    %4 = vector.load %arg1[%c8, %c0_2] : memref<36x128xf32, #tpu.memory_space<vmem>>, vector<8x128xf32>
    %c16 = arith.constant 16 : index
    %c0_3 = arith.constant 0 : index
    %5 = vector.load %arg1[%c16, %c0_3] : memref<36x128xf32, #tpu.memory_space<vmem>>, vector<2x128xf32>
    %c18 = arith.constant 18 : index
    %c0_4 = arith.constant 0 : index
    %6 = vector.load %arg1[%c18, %c0_4] : memref<36x128xf32, #tpu.memory_space<vmem>>, vector<2x128xf32>
    %c20 = arith.constant 20 : index
    %c0_5 = arith.constant 0 : index
    %7 = vector.load %arg1[%c20, %c0_5] : memref<36x128xf32, #tpu.memory_space<vmem>>, vector<2x128xf32>
    %c22 = arith.constant 22 : index
    %c0_6 = arith.constant 0 : index
    %8 = vector.load %arg1[%c22, %c0_6] : memref<36x128xf32, #tpu.memory_space<vmem>>, vector<2x128xf32>
    %c24 = arith.constant 24 : index
    %c0_7 = arith.constant 0 : index
    %9 = vector.load %arg1[%c24, %c0_7] : memref<36x128xf32, #tpu.memory_space<vmem>>, vector<2x128xf32>
    %c26 = arith.constant 26 : index
    %c0_8 = arith.constant 0 : index
    %10 = vector.load %arg1[%c26, %c0_8] : memref<36x128xf32, #tpu.memory_space<vmem>>, vector<2x128xf32>
    %c28 = arith.constant 28 : index
    %c0_9 = arith.constant 0 : index
    %11 = vector.load %arg1[%c28, %c0_9] : memref<36x128xf32, #tpu.memory_space<vmem>>, vector<2x128xf32>
    %c30 = arith.constant 30 : index
    %c0_10 = arith.constant 0 : index
    %12 = vector.load %arg1[%c30, %c0_10] : memref<36x128xf32, #tpu.memory_space<vmem>>, vector<2x128xf32>
    %c32 = arith.constant 32 : index
    %c0_11 = arith.constant 0 : index
    %13 = vector.load %arg1[%c32, %c0_11] : memref<36x128xf32, #tpu.memory_space<vmem>>, vector<2x128xf32>
    %c34 = arith.constant 34 : index
    %c0_12 = arith.constant 0 : index
    %14 = vector.load %arg1[%c34, %c0_12] : memref<36x128xf32, #tpu.memory_space<vmem>>, vector<2x128xf32>
    %cst = arith.constant 5.000000e-01 : f32
    %15 = vector.broadcast %cst : f32 to vector<2x128xf32>
    %16 = arith.mulf %15, %9 : vector<2x128xf32>
    %17 = arith.subf %7, %16 : vector<2x128xf32>
    %cst_13 = arith.constant 5.000000e-01 : f32
    %18 = vector.broadcast %cst_13 : f32 to vector<2x128xf32>
    %19 = arith.mulf %18, %10 : vector<2x128xf32>
    %20 = arith.subf %8, %19 : vector<2x128xf32>
    %cst_14 = arith.constant 5.000000e-01 : f32
    %21 = vector.broadcast %cst_14 : f32 to vector<2x128xf32>
    %22 = arith.mulf %21, %9 : vector<2x128xf32>
    %23 = arith.addf %7, %22 : vector<2x128xf32>
    %cst_15 = arith.constant 5.000000e-01 : f32
    %24 = vector.broadcast %cst_15 : f32 to vector<2x128xf32>
    %25 = arith.mulf %24, %10 : vector<2x128xf32>
    %26 = arith.addf %8, %25 : vector<2x128xf32>
    %cst_16 = arith.constant 5.000000e-01 : f32
    %27 = vector.broadcast %cst_16 : f32 to vector<2x128xf32>
    %28 = arith.mulf %27, %13 : vector<2x128xf32>
    %29 = arith.subf %11, %28 : vector<2x128xf32>
    %cst_17 = arith.constant 5.000000e-01 : f32
    %30 = vector.broadcast %cst_17 : f32 to vector<2x128xf32>
    %31 = arith.mulf %30, %14 : vector<2x128xf32>
    %32 = arith.subf %12, %31 : vector<2x128xf32>
    %cst_18 = arith.constant 5.000000e-01 : f32
    %33 = vector.broadcast %cst_18 : f32 to vector<2x128xf32>
    %34 = arith.mulf %33, %13 : vector<2x128xf32>
    %35 = arith.addf %11, %34 : vector<2x128xf32>
    %cst_19 = arith.constant 5.000000e-01 : f32
    %36 = vector.broadcast %cst_19 : f32 to vector<2x128xf32>
    %37 = arith.mulf %36, %14 : vector<2x128xf32>
    %38 = arith.addf %12, %37 : vector<2x128xf32>
    %39 = arith.minimumf %23, %35 : vector<2x128xf32>
    %40 = arith.maximumf %17, %29 : vector<2x128xf32>
    %41 = arith.subf %39, %40 : vector<2x128xf32>
    %cst_20 = arith.constant 0.000000e+00 : f32
    %42 = vector.broadcast %cst_20 : f32 to vector<2x128xf32>
    %43 = arith.maximumf %41, %42 : vector<2x128xf32>
    %44 = arith.minimumf %26, %38 : vector<2x128xf32>
    %45 = arith.maximumf %20, %32 : vector<2x128xf32>
    %46 = arith.subf %44, %45 : vector<2x128xf32>
    %cst_21 = arith.constant 0.000000e+00 : f32
    %47 = vector.broadcast %cst_21 : f32 to vector<2x128xf32>
    %48 = arith.maximumf %46, %47 : vector<2x128xf32>
    %49 = arith.mulf %43, %48 : vector<2x128xf32>
    %50 = arith.subf %23, %17 : vector<2x128xf32>
    %51 = arith.subf %26, %20 : vector<2x128xf32>
    %52 = arith.mulf %50, %51 : vector<2x128xf32>
    %53 = arith.subf %35, %29 : vector<2x128xf32>
    %54 = arith.subf %38, %32 : vector<2x128xf32>
    %55 = arith.mulf %53, %54 : vector<2x128xf32>
    %56 = arith.addf %52, %55 : vector<2x128xf32>
    %57 = arith.subf %56, %49 : vector<2x128xf32>
    %cst_22 = arith.constant 9.99999971E-10 : f32
    %58 = vector.broadcast %cst_22 : f32 to vector<2x128xf32>
    %59 = arith.addf %57, %58 : vector<2x128xf32>
    %60 = tpu.reciprocal %59 {approx = true} : vector<2x128xf32> -> vector<2x128xf32>
    %61 = arith.mulf %49, %60 : vector<2x128xf32>
    %cst_23 = arith.constant 1.000000e+00 : f32
    %62 = vector.broadcast %cst_23 : f32 to vector<1x128xf32>
    %63 = vector.extract_strided_slice %61 {offsets = [0, 0], sizes = [1, 128], strides = [1, 1]} : vector<2x128xf32> to vector<1x128xf32>
    %64 = vector.extract_strided_slice %61 {offsets = [1, 0], sizes = [1, 128], strides = [1, 1]} : vector<2x128xf32> to vector<1x128xf32>
    %65 = arith.cmpf oge, %63, %64 : vector<1x128xf32>
    %66 = arith.extui %65 : vector<1x128xi1> to vector<1x128xi32>
    %67 = arith.sitofp %66 : vector<1x128xi32> to vector<1x128xf32>
    %68 = arith.mulf %62, %67 : vector<1x128xf32>
    %cst_24 = arith.constant 1.000000e+00 : f32
    %69 = vector.broadcast %cst_24 : f32 to vector<1x128xf32>
    %70 = vector.extract_strided_slice %61 {offsets = [1, 0], sizes = [1, 128], strides = [1, 1]} : vector<2x128xf32> to vector<1x128xf32>
    %71 = vector.extract_strided_slice %61 {offsets = [0, 0], sizes = [1, 128], strides = [1, 1]} : vector<2x128xf32> to vector<1x128xf32>
    %72 = arith.cmpf ogt, %70, %71 : vector<1x128xf32>
    %73 = arith.extui %72 : vector<1x128xi1> to vector<1x128xi32>
    %74 = arith.sitofp %73 : vector<1x128xi32> to vector<1x128xf32>
    %75 = arith.mulf %69, %74 : vector<1x128xf32>
    %76 = tpu.concatenate %68, %75 in 0 : vector<1x128xf32>, vector<1x128xf32> -> vector<2x128xf32>
    %cst_25 = arith.constant 0.000000e+00 : f32
    %77 = vector.broadcast %cst_25 : f32 to vector<2x128xf32>
    %78 = arith.cmpf one, %6, %77 : vector<2x128xf32>
    %cst_26 = arith.constant 0.000000e+00 : f32
    %79 = vector.broadcast %cst_26 : f32 to vector<2x128xf32>
    %80 = arith.select %78, %76, %79 : vector<2x128xi1>, vector<2x128xf32>
    %cst_27 = arith.constant 0.000000e+00 : f32
    %81 = vector.broadcast %cst_27 : f32 to vector<2x128xf32>
    %82 = arith.cmpf ogt, %80, %81 : vector<2x128xf32>
    %cst_28 = arith.constant 1.000000e+00 : f32
    %83 = vector.broadcast %cst_28 : f32 to vector<2x128xf32>
    %84 = arith.cmpf oeq, %6, %83 : vector<2x128xf32>
    %85 = arith.extui %84 : vector<2x128xi1> to vector<2x128xi32>
    %86 = arith.sitofp %85 : vector<2x128xi32> to vector<2x128xf32>
    %cst_29 = arith.constant dense<0x7F800000> : vector<128xf32>
    %87 = vector.multi_reduction <minimumf>, %86, %cst_29 [0] : vector<2x128xf32> to vector<128xf32>
    %88 = vector.shape_cast %87 : vector<128xf32> to vector<1x128xf32>
    %89 = arith.subf %7, %11 : vector<2x128xf32>
    %90 = arith.mulf %89, %89 : vector<2x128xf32>
    %91 = arith.subf %8, %12 : vector<2x128xf32>
    %92 = arith.mulf %91, %91 : vector<2x128xf32>
    %93 = arith.addf %90, %92 : vector<2x128xf32>
    %cst_30 = arith.constant 1.000000e+00 : f32
    %94 = vector.broadcast %cst_30 : f32 to vector<2x128xf32>
    %95 = arith.select %82, %9, %94 : vector<2x128xi1>, vector<2x128xf32>
    %96 = math.sqrt %95 : vector<2x128xf32>
    %cst_31 = arith.constant 1.000000e+00 : f32
    %97 = vector.broadcast %cst_31 : f32 to vector<2x128xf32>
    %98 = arith.select %82, %13, %97 : vector<2x128xi1>, vector<2x128xf32>
    %99 = math.sqrt %98 : vector<2x128xf32>
    %100 = arith.subf %96, %99 : vector<2x128xf32>
    %101 = arith.mulf %100, %100 : vector<2x128xf32>
    %102 = arith.addf %93, %101 : vector<2x128xf32>
    %cst_32 = arith.constant 1.000000e+00 : f32
    %103 = vector.broadcast %cst_32 : f32 to vector<2x128xf32>
    %104 = arith.select %82, %10, %103 : vector<2x128xi1>, vector<2x128xf32>
    %105 = math.sqrt %104 : vector<2x128xf32>
    %cst_33 = arith.constant 1.000000e+00 : f32
    %106 = vector.broadcast %cst_33 : f32 to vector<2x128xf32>
    %107 = arith.select %82, %14, %106 : vector<2x128xi1>, vector<2x128xf32>
    %108 = math.sqrt %107 : vector<2x128xf32>
    %109 = arith.subf %105, %108 : vector<2x128xf32>
    %110 = arith.mulf %109, %109 : vector<2x128xf32>
    %111 = arith.addf %102, %110 : vector<2x128xf32>
    %112 = arith.subf %5, %61 : vector<2x128xf32>
    %113 = arith.mulf %112, %112 : vector<2x128xf32>
    %cst_34 = arith.constant 5.000000e+00 : f32
    %114 = vector.broadcast %cst_34 : f32 to vector<2x128xf32>
    %115 = arith.mulf %114, %80 : vector<2x128xf32>
    %116 = arith.mulf %115, %111 : vector<2x128xf32>
    %cst_35 = arith.constant 1.000000e+00 : f32
    %117 = vector.broadcast %cst_35 : f32 to vector<2x128xf32>
    %118 = arith.mulf %117, %80 : vector<2x128xf32>
    %119 = arith.mulf %118, %113 : vector<2x128xf32>
    %120 = arith.addf %116, %119 : vector<2x128xf32>
    %cst_36 = arith.constant 1.000000e+00 : f32
    %121 = vector.broadcast %cst_36 : f32 to vector<2x128xf32>
    %122 = arith.subf %121, %80 : vector<2x128xf32>
    %cst_37 = arith.constant 5.000000e-01 : f32
    %123 = vector.broadcast %cst_37 : f32 to vector<2x128xf32>
    %124 = arith.mulf %123, %122 : vector<2x128xf32>
    %125 = arith.mulf %124, %5 : vector<2x128xf32>
    %126 = arith.mulf %125, %5 : vector<2x128xf32>
    %127 = arith.addf %120, %126 : vector<2x128xf32>
    %cst_38 = arith.constant 1.000000e+00 : f32
    %128 = vector.broadcast %cst_38 : f32 to vector<1x128xf32>
    %129 = arith.mulf %128, %88 : vector<1x128xf32>
    %130 = arith.subf %3, %4 : vector<8x128xf32>
    %131 = arith.mulf %130, %130 : vector<8x128xf32>
    %132 = vector.broadcast %129 : vector<1x128xf32> to vector<8x128xf32>
    %133 = arith.mulf %132, %131 : vector<8x128xf32>
    %cst_39 = arith.constant dense<0.000000e+00> : vector<128xf32>
    %134 = vector.multi_reduction <add>, %127, %cst_39 [0] : vector<2x128xf32> to vector<128xf32>
    %135 = vector.shape_cast %134 : vector<128xf32> to vector<1x128xf32>
    %cst_40 = arith.constant dense<0.000000e+00> : vector<128xf32>
    %136 = vector.multi_reduction <add>, %133, %cst_40 [0] : vector<8x128xf32> to vector<128xf32>
    %137 = vector.shape_cast %136 : vector<128xf32> to vector<1x128xf32>
    %138 = arith.addf %135, %137 : vector<1x128xf32>
    %c0_41 = arith.constant 0 : index
    %c0_42 = arith.constant 0 : index
    %139 = memref.load %arg3[%c0_41, %c0_42] : memref<1x1xf32, #tpu.memory_space<smem>>
    %140 = vector.shape_cast %138 : vector<1x128xf32> to vector<1x1x128xf32>
    %cst_43 = arith.constant dense<0.000000e+00> : vector<1xf32>
    %141 = vector.multi_reduction <add>, %140, %cst_43 [1, 2] : vector<1x1x128xf32> to vector<1xf32>
    %142 = vector.shape_cast %141 : vector<1xf32> to vector<1x1x1xf32>
    %143 = vector.extract %142[0, 0, 0] : f32 from vector<1x1x1xf32>
    %144 = arith.addf %139, %143 : f32
    %c0_44 = arith.constant 0 : index
    %c0_45 = arith.constant 0 : index
    %145 = memref.load %arg3[%c0_44, %c0_45] : memref<1x1xf32, #tpu.memory_space<smem>>
    memref.store %144, %arg3[%c0_44, %c0_45] : memref<1x1xf32, #tpu.memory_space<smem>>
    %c0_i32_46 = arith.constant 0 : i32
    %146 = arith.cmpi eq, %arg0, %c0_i32_46 : i32
    %147 = arith.extui %146 : i1 to i32
    %c0_i32_47 = arith.constant 0 : i32
    %148 = arith.cmpi ne, %147, %c0_i32_47 : i32
    scf.if %148 {
      %c0_48 = arith.constant 0 : index
      %c0_49 = arith.constant 0 : index
      %149 = memref.load %arg3[%c0_48, %c0_49] : memref<1x1xf32, #tpu.memory_space<smem>>
      %cst_50 = arith.constant 5.000000e-01 : f32
      %150 = arith.mulf %149, %cst_50 : f32
      %c0_51 = arith.constant 0 : index
      %c0_52 = arith.constant 0 : index
      %151 = memref.load %arg2[%c0_51, %c0_52] : memref<1x1xf32, #tpu.memory_space<smem>>
      memref.store %150, %arg2[%c0_51, %c0_52] : memref<1x1xf32, #tpu.memory_space<smem>>
    } else {
    }
    return
  }
  func.func @transform_0(%arg0: i32) -> (i32, i32) {
    %c0_i32 = arith.constant 0 : i32
    %c0_i32_0 = arith.constant 0 : i32
    return %c0_i32, %arg0 : i32, i32
  }
  func.func @transform_1(%arg0: i32) -> (i32, i32) {
    %c0_i32 = arith.constant 0 : i32
    %c0_i32_0 = arith.constant 0 : i32
    %c0_i32_1 = arith.constant 0 : i32
    return %c0_i32, %c0_i32_0 : i32, i32
  }
}

</mosaic_0001>

<llo_original>
// kernel: tpu_custom_call.1
$region0: #{tpu_custom_call.1}
  #allocation0 [shape = 'u32[]', space=smem, size = 0x4, offset = 0x4, fixed_abs, tag = 'smem constant byte address 0x4 - core index']
  #allocation1 [shape = 'u32[144,128]{1,0:T(1,128)}', space=vmem, size = 0x12000, scoped, tag = 'internal scratch']
  #allocation2 [shape = 'f32[1,1]{1,0:T(1,128)}', space=smem, size = 0x200, scoped, tag = 'scratch operand']
  %s0 = inlined_call_operand.hbm [shape: f32[36,128], index: 0, kind: input, shape index: {}]
  %s1 = inlined_call_operand.hbm [shape: f32[1,1], index: 1, kind: output, shape index: {}]
  %s2 = sld [smem:[#allocation0]]
  $region26: #{tpu_custom_call.1} parent=0
    _
  %s4 = ssub.s32 1, %s2
  %s5 = scalar_select 0, %s4, %s2
  $region1: #{tpu_custom_call.1} parent=0
    #allocation3 [shape = 'u8[20480]{0}', space=vmem, size = 0x5000, scoped, tag = 'input window, operand 0, single buffered']
    #allocation4 [shape = 's32[1]{0}', space=sflag, size = 0x4, scoped, tag = 'scoped memory for tpu_custom_call.1']
    #allocation5 [shape = 's32[1]{0}', space=sflag, size = 0x4, scoped, tag = 'scoped memory for tpu_custom_call.1']
    #allocation6 [shape = 'u8[512]{0}', space=smem, size = 0x200, scoped, tag = 'output window, operand 0, single buffered']
    %6 = vsyncpa [#allocation4], 0
    %7 = vsyncpa [#allocation5], 0
    // Predicated region
    $region2: #{tpu_custom_call.1} parent=1 // pred_check
      _
    $region3: #{tpu_custom_call.1} parent=1 // pred_check_branch
      %9 = sbr.rel (0) target = $region5
    $region4: #{tpu_custom_call.1} parent=1 // pred_region
      %s11 = ssub.s32 640, 640
      %12 = vsyncadd [#allocation4], %s11
      %s13 = sshll.u32 [#allocation3], 4
      %s14 = int_to_ptr.vmem [resolvable:$true] %s13
      %19 = dma.hbm_to_vmem [thread:$0]  %s0, 640, %s14, [#allocation4], 128, 128, 8
    $region5: #{tpu_custom_call.1} parent=1 // pred_fallthru
      _
    // Predicated region
    $region6: #{tpu_custom_call.1} parent=1 // pred_check
      _
    $region7: #{tpu_custom_call.1} parent=1 // pred_check_branch
      %21 = sbr.rel (0) target = $region9
    $region8: #{tpu_custom_call.1} parent=1 // pred_region
      %22 = dma.done [#allocation4], 640
    $region9: #{tpu_custom_call.1} parent=1 // pred_fallthru
      _
    %p23 = scmp.eq.s32.totalorder 0, 0
    // Predicated region
    $region10: #{tpu_custom_call.1} parent=1 // pred_check
      %p24 = pneg %p23
    $region11: #{tpu_custom_call.1} parent=1 // pred_check_branch
      %26 = sbr.rel (%p24) target = $region13
    $region12: #{tpu_custom_call.1} parent=1 // pred_region
      %s27 = scalar_lea.smem [#allocation2], 0
      %28 = sst [smem:[%s27]] 0.0
    $region13: #{tpu_custom_call.1} parent=1 // pred_fallthru
      _
    %v29 = vld [vmem:[#allocation3] sm:$0xff]
    %v30 = vld [vmem:[#allocation3 + $0x8] sm:$0xff]
    %v31 = vld [vmem:[#allocation3 + $0x10] sm:$0x3]
    %v32 = vld [vmem:[#allocation3 + $0x12] sm:$0x3]
    %v33 = vld [vmem:[#allocation3 + $0x14] sm:$0x3]
    %v34 = vld [vmem:[#allocation3 + $0x16] sm:$0x3]
    %v35 = vld [vmem:[#allocation3 + $0x18] sm:$0x3]
    %v36 = vld [vmem:[#allocation3 + $0x1a] sm:$0x3]
    %v37 = vld [vmem:[#allocation3 + $0x1c] sm:$0x3]
    %v38 = vld [vmem:[#allocation3 + $0x1e] sm:$0x3]
    %v39 = vld [vmem:[#allocation3 + $0x20] sm:$0x3]
    %v40 = vld [vmem:[#allocation3 + $0x22] sm:$0x3]
    %v41 = vmul.f32 %v35, 0.5
    %v42 = vsub.f32 %v33, %v41
    %v43 = vmul.f32 %v36, 0.5
    %v44 = vsub.f32 %v34, %v43
    %v45 = vadd.f32 %v33, %v41
    %v46 = vadd.f32 %v34, %v43
    %v47 = vmul.f32 %v39, 0.5
    %v48 = vsub.f32 %v37, %v47
    %v49 = vmul.f32 %v40, 0.5
    %v50 = vsub.f32 %v38, %v49
    %v51 = vadd.f32 %v37, %v47
    %v52 = vadd.f32 %v38, %v49
    %v53 = vmin.f32 %v45, %v51
    %v54 = vmax.f32 %v42, %v48
    %v55 = vsub.f32 %v53, %v54
    %v56 = vmax.f32 %v55, 0.0
    %v57 = vmin.f32 %v46, %v52
    %v58 = vmax.f32 %v44, %v50
    %v59 = vsub.f32 %v57, %v58
    %v60 = vmax.f32 %v59, 0.0
    %v61 = vmul.f32 %v56, %v60
    %v62 = vsub.f32 %v45, %v42
    %v63 = vsub.f32 %v46, %v44
    %v64 = vmul.f32 %v62, %v63
    %v65 = vsub.f32 %v51, %v48
    %v66 = vsub.f32 %v52, %v50
    %v67 = vmul.f32 %v65, %v66
    %v68 = vadd.f32 %v64, %v67
    %v69 = vsub.f32 %v68, %v61
    %v70 = vadd.f32 %v69, 1e-09
    %v71 = vrcp.pop %v70
    %v72 = vmul.f32 %v61, %v71
    %v74 = vrot.slane %v72, 1
    %vm76 = vcmp.ge.f32.partialorder %v72, %v74
    %v77 = vsel %vm76, 1, 0
    %v78 = vcvt.s32.f32 %v77
    %v79 = vrot.slane %v72, 7
    %vm81 = vcmp.gt.f32.partialorder %v72, %v79
    %v82 = vsel %vm81, 1, 0
    %v83 = vcvt.s32.f32 %v82
    %vm84 = vcmask 1040384
    %v85 = vsel %vm84, %v78, %v83
    %vm86 = vcmp.ne.f32.partialorder %v32, 0.0
    %v87 = vsel %vm86, %v85, 0.0
    %vm88 = vcmp.gt.f32.partialorder %v87, 0.0
    %vm89 = vcmp.eq.f32.partialorder %v32, 1.0
    %v90 = vsel %vm89, 1, 0
    %v91 = vcvt.s32.f32 %v90
    %vm92 = vcmask 1041408
    %v93 = vsel %vm92, %v91, inf
    %v94 = vrot.slane %v93, 4
    %v95 = vmin.f32 %v93, %v94
    %v96 = vrot.slane %v95, 2
    %v97 = vmin.f32 %v95, %v96
    %v98 = vrot.slane %v97, 1
    %v99 = vmin.f32 %v97, %v98
    %v100 = vsub.f32 %v33, %v37
    %v101 = vmul.f32 %v100, %v100
    %v102 = vsub.f32 %v34, %v38
    %v103 = vmul.f32 %v102, %v102
    %v104 = vadd.f32 %v101, %v103
    %v105 = vsel %vm88, %v35, 1.0
    %v106 = vrsqrt.pop %v105
    %v107 = vmul.f32 %v105, %v106
    %vm108 = vcmp.eq.f32.partialorder %v105, inf
    %v109 = vsel %vm108, %v105, %v107
    %vm110 = vcmp.eq.f32.partialorder %v105, 0.0
    %v111 = vand.u32 %v105, 2147483648
    %v112 = vsel %vm110, %v111, %v109
    %v113 = vsel %vm88, %v39, 1.0
    %v114 = vrsqrt.pop %v113
    %v115 = vmul.f32 %v113, %v114
    %vm116 = vcmp.eq.f32.partialorder %v113, inf
    %v117 = vsel %vm116, %v113, %v115
    %vm118 = vcmp.eq.f32.partialorder %v113, 0.0
    %v119 = vand.u32 %v113, 2147483648
    %v120 = vsel %vm118, %v119, %v117
    %v121 = vsub.f32 %v112, %v120
    %v122 = vmul.f32 %v121, %v121
    %v123 = vadd.f32 %v104, %v122
    %v124 = vsel %vm88, %v36, 1.0
    %v125 = vrsqrt.pop %v124
    %v126 = vmul.f32 %v124, %v125
    %vm127 = vcmp.eq.f32.partialorder %v124, inf
    %v128 = vsel %vm127, %v124, %v126
    %vm129 = vcmp.eq.f32.partialorder %v124, 0.0
    %v130 = vand.u32 %v124, 2147483648
    %v131 = vsel %vm129, %v130, %v128
    %v132 = vsel %vm88, %v40, 1.0
    %v133 = vrsqrt.pop %v132
    %v134 = vmul.f32 %v132, %v133
    %vm135 = vcmp.eq.f32.partialorder %v132, inf
    %v136 = vsel %vm135, %v132, %v134
    %vm137 = vcmp.eq.f32.partialorder %v132, 0.0
    %v138 = vand.u32 %v132, 2147483648
    %v139 = vsel %vm137, %v138, %v136
    %v140 = vsub.f32 %v131, %v139
    %v141 = vmul.f32 %v140, %v140
    %v142 = vadd.f32 %v123, %v141
    %v143 = vsub.f32 %v31, %v72
    %v144 = vmul.f32 %v143, %v143
    %v145 = vmul.f32 %v87, 5.0
    %v146 = vmul.f32 %v145, %v142
    %v147 = vmul.f32 %v87, %v144
    %v148 = vadd.f32 %v146, %v147
    %v149 = vsub.f32 1.0, %v87
    %v150 = vmul.f32 %v149, 0.5
    %v151 = vmul.f32 %v150, %v31
    %v152 = vmul.f32 %v151, %v31
    %v153 = vadd.f32 %v148, %v152
    %v154 = vsub.f32 %v29, %v30
    %v155 = vmul.f32 %v154, %v154
    %v156 = vmul.f32 %v99, %v155
    %v157 = vsel %vm92, %v153, 0.0
    %v158 = vrot.slane %v157, 4
    %v159 = vadd.f32 %v157, %v158
    %v160 = vrot.slane %v159, 2
    %v161 = vadd.f32 %v159, %v160
    %v162 = vrot.slane %v161, 1
    %v163 = vadd.f32 %v161, %v162
    %v164 = vrot.slane %v156, 4
    %v165 = vadd.f32 %v156, %v164
    %v166 = vrot.slane %v165, 2
    %v167 = vadd.f32 %v165, %v166
    %v168 = vrot.slane %v167, 1
    %v169 = vadd.f32 %v167, %v168
    %v170 = vadd.f32 %v163, %v169
    %s171 = sld [smem:[#allocation2]]
    %v172 = vsel %vm84, %v170, 0.0
    %173 = vadd.xlane.f32.xlu0 %v172
    %v174 = vpop.xlane.xlu0 %173
    %v175 = vrot.slane %v174, 4
    %v176 = vadd.f32 %v174, %v175
    %v177 = vrot.slane %v176, 2
    %v178 = vadd.f32 %v176, %v177
    %v179 = vrot.slane %v178, 1
    %v180 = vadd.f32 %v178, %v179
    %s181 = vtos %v180
    %s182 = sadd.f32 %s171, %s181
    %s183 = scalar_lea.smem [#allocation2], 0
    %184 = sst [smem:[%s183]] %s182
    // Predicated region
    $region14: #{tpu_custom_call.1} parent=1 // pred_check
      %p185 = pneg %p23
    $region15: #{tpu_custom_call.1} parent=1 // pred_check_branch
      %187 = sbr.rel (%p185) target = $region17
    $region16: #{tpu_custom_call.1} parent=1 // pred_region
      %s188 = sld [smem:[#allocation2]]
      %s189 = smul.f32 %s188, 0.5
      %s190 = scalar_lea.smem [#allocation6], 0
      %191 = sst [smem:[%s190]] %s189
    $region17: #{tpu_custom_call.1} parent=1 // pred_fallthru
      _
    // Predicated region
    $region18: #{tpu_custom_call.1} parent=1 // pred_check
      _
    $region19: #{tpu_custom_call.1} parent=1 // pred_check_branch
      %193 = sbr.rel (0) target = $region21
    $region20: #{tpu_custom_call.1} parent=1 // pred_region
      %s195 = ssub.s32 16, 16
      %196 = vsyncadd [#allocation5], %s195
      %199 = dma.smem_to_hbm [#allocation6], 16, %s1, [#allocation5]
    $region21: #{tpu_custom_call.1} parent=1 // pred_fallthru
      _
    // Predicated region
    $region22: #{tpu_custom_call.1} parent=1 // pred_check
      _
    $region23: #{tpu_custom_call.1} parent=1 // pred_check_branch
      %201 = sbr.rel (0) target = $region25
    $region24: #{tpu_custom_call.1} parent=1 // pred_region
      %202 = dma.done [#allocation5], 16
    $region25: #{tpu_custom_call.1} parent=1 // pred_fallthru
      _
    %203 = sfence
    %204 = vsyncpa [#allocation4], 1
    %205 = vsyncpa [#allocation5], 1

</llo_original>
